<compile_context>
chip_gen: v6e
topology: v6e:2x2x1
jax: 0.10.0
libtpu: 0.0.40
codegen_flags: <defaults>
</compile_context>

<pallas_src>
import functools

import jax
import jax.numpy as jnp
from jax.experimental import pallas as pl
from jax.experimental.pallas import tpu as pltpu


# ----------------------------------------------------------------------------
# Kernel
# ----------------------------------------------------------------------------
def _gelu_exact(v):
    # PyTorch nn.GELU() default = exact (erf-based) GELU.
    return 0.5 * v * (1.0 + jax.lax.erf(v * jnp.float32(0.70710678118654752)))


def _mlp_kernel(x_ref, w1x, b1, w2, b2, w3, b3, w4, b4, w5, b5, w6, b6, o_ref):
    # First layer: the time contribution is already folded into b1 by the
    # wrapper, so the contraction is over dim_in only.
    h = jnp.dot(x_ref[...], w1x[...], preferred_element_type=jnp.float32) + b1[...]
    h = _gelu_exact(h)
    h = _gelu_exact(jnp.dot(h, w2[...], preferred_element_type=jnp.float32) + b2[...])
    h = _gelu_exact(jnp.dot(h, w3[...], preferred_element_type=jnp.float32) + b3[...])
    h = _gelu_exact(jnp.dot(h, w4[...], preferred_element_type=jnp.float32) + b4[...])
    h = _gelu_exact(jnp.dot(h, w5[...], preferred_element_type=jnp.float32) + b5[...])
    o_ref[...] = jnp.dot(h, w6[...], preferred_element_type=jnp.float32) + b6[...]


# ----------------------------------------------------------------------------
# Wrapper
# ----------------------------------------------------------------------------
def _round_up(n, m):
    return ((n + m - 1) // m) * m


def _resident(shape):
    # Same block at every grid step -> stays resident in VMEM (loaded once).
    return pl.BlockSpec(shape, lambda i: (0,) * len(shape))


@functools.partial(jax.jit, static_argnames=("block_m",))
def mlp_forward(t, x, params, *, block_m=512):
    """Equivalent of MLP.forward(t, x).

    t: scalar () or per-row array (B, 1) / (B,)
    x: (B, dim_in)  -> output (B, dim_in), float32
    """
    x = x.astype(jnp.float32)
    B, dim_in = x.shape
    (w1, b1), (w2, b2), (w3, b3), (w4, b4), (w5, b5), (w6, b6) = params
    H = w1.shape[1]
    dim_out = w6.shape[1]

    # ---- fold t into the first-layer bias (no hstack, no K=dim_in+1 matmul) ----
    t = jnp.asarray(t, dtype=jnp.float32)
    w1_t = w1[0:1, :]      # (1, H)      time row of W1
    w1_x = w1[1:, :]       # (dim_in, H) feature rows of W1

    # ---- batch tiling ----
    tm = min(block_m, _round_up(B, 8))
    grid = (pl.cdiv(B, tm),)

    if t.ndim == 0:
        b1_eff = b1 + t * w1_t                       # (1, H): broadcast bias
        b1_spec = _resident((1, H))
    else:
        t_col = t.reshape(B, 1).astype(jnp.float32)
        b1_eff = b1 + t_col * w1_t                   # (B, H): per-row bias
        b1_spec = pl.BlockSpec((tm, H), lambda i: (i, 0))

    in_specs = [
        pl.BlockSpec((tm, dim_in), lambda i: (i, 0)),   # x tile (pipelined)
        _resident(w1_x.shape), b1_spec,
        _resident(w2.shape), _resident(b2.shape),
        _resident(w3.shape), _resident(b3.shape),
        _resident(w4.shape), _resident(b4.shape),
        _resident(w5.shape), _resident(b5.shape),
        _resident(w6.shape), _resident(b6.shape),
    ]

    out = pl.pallas_call(
        _mlp_kernel,
        out_shape=jax.ShapeDtypeStruct((B, dim_out), jnp.float32),
        grid=grid,
        in_specs=in_specs,
        out_specs=pl.BlockSpec((tm, dim_out), lambda i: (i, 0)),
        compiler_params=pltpu.CompilerParams(
            # Batch axis is embarrassingly parallel -> sharded across the 2
            # TensorCores on v7x; harmless on single-TC v5e/v6e.
            dimension_semantics=("parallel",),
        ),
    )(x, w1_x, b1_eff, w2, b2, w3, b3, w4, b4, w5, b5, w6, b6)
    return out


def init_params(key, dim_in, dim_hidden):
    """Deterministic parameter init (weights stored as (in, out); biases (1, out))."""
    dims = [(dim_in + 1, dim_hidden),
            (dim_hidden, dim_hidden),
            (dim_hidden, dim_hidden),
            (dim_hidden, dim_hidden),
            (dim_hidden, dim_hidden),
            (dim_hidden, dim_in)]
    params = []
    for (din, dout) in dims:
        key, kw, kb = jax.random.split(key, 3)
        bound = 1.0 / jnp.sqrt(din)
        w = jax.random.uniform(kw, (din, dout), jnp.float32, -bound, bound)
        b = jax.random.uniform(kb, (1, dout), jnp.float32, -bound, bound)
        params.append((w, b))
    return params


# ----------------------------------------------------------------------------
# Reference (pure JAX, mirrors the PyTorch forward) for a sanity check
# ----------------------------------------------------------------------------
def mlp_reference(t, x, params):
    x = x.astype(jnp.float32)
    B = x.shape[0]
    t = jnp.asarray(t, dtype=jnp.float32)
    if t.ndim == 0:
        t = jnp.ones((B, 1), jnp.float32) * t
    else:
        t = t.reshape(B, 1)
    h = jnp.hstack([t, x])
    for i, (w, b) in enumerate(params):
        h = h @ w + b
        if i < len(params) - 1:
            h = 0.5 * h * (1.0 + jax.lax.erf(h / jnp.sqrt(2.0)))
    return h


if __name__ == "__main__":
    dim_in = 4
    dim_hidden = 32
    batch = 8

    key = jax.random.PRNGKey(0)
    kp, kx, kt = jax.random.split(key, 3)

    params = init_params(kp, dim_in, dim_hidden)
    x = jax.random.normal(kx, (batch, dim_in), jnp.float32)

    # Scalar-t path (same as the PyTorch broadcast path).
    t_scalar = jnp.asarray(0.5, dtype=jnp.float32)
    out = jax.block_until_ready(mlp_forward(t_scalar, x, params))
    ref = mlp_reference(t_scalar, x, params)
    assert out.shape == (batch, dim_in)
    assert jnp.allclose(out, ref, atol=1e-4, rtol=1e-4), "scalar-t mismatch vs JAX reference"

    # Per-row t path.
    t_vec = jax.random.uniform(kt, (batch, 1), jnp.float32)
    out_v = jax.block_until_ready(mlp_forward(t_vec, x, params))
    ref_v = mlp_reference(t_vec, x, params)
    assert jnp.allclose(out_v, ref_v, atol=1e-4, rtol=1e-4), "vector-t mismatch vs JAX reference"

    print("KERNEL_OK")
</pallas_src>

<mosaic_0001>
module attributes {stable_mosaic.version = 11 : i64} {
  func.func @_mlp_kernel(%arg0: i32, %arg1: memref<8x4xf32, #tpu.memory_space<vmem>>, %arg2: memref<4x32xf32, #tpu.memory_space<vmem>>, %arg3: memref<1x32xf32, #tpu.memory_space<vmem>>, %arg4: memref<32x32xf32, #tpu.memory_space<vmem>>, %arg5: memref<1x32xf32, #tpu.memory_space<vmem>>, %arg6: memref<32x32xf32, #tpu.memory_space<vmem>>, %arg7: memref<1x32xf32, #tpu.memory_space<vmem>>, %arg8: memref<32x32xf32, #tpu.memory_space<vmem>>, %arg9: memref<1x32xf32, #tpu.memory_space<vmem>>, %arg10: memref<32x32xf32, #tpu.memory_space<vmem>>, %arg11: memref<1x32xf32, #tpu.memory_space<vmem>>, %arg12: memref<32x4xf32, #tpu.memory_space<vmem>>, %arg13: memref<1x4xf32, #tpu.memory_space<vmem>>, %arg14: memref<8x4xf32, #tpu.memory_space<vmem>>) attributes {dimension_semantics = [#tpu.dimension_semantics<parallel>], iteration_bounds = array<i64: 1>, scalar_prefetch = 0 : i64, scratch_operands = 0 : i64, tpu.core_type = #tpu.core_type<tc>, window_params = [{transform_indices = @transform_0, window_bounds = array<i64: 8, 4>}, {pipeline_mode = #tpu.pipeline_mode<synchronous>, transform_indices = @transform_1, window_bounds = array<i64: 4, 32>}, {pipeline_mode = #tpu.pipeline_mode<synchronous>, transform_indices = @transform_2, window_bounds = array<i64: 1, 32>}, {pipeline_mode = #tpu.pipeline_mode<synchronous>, transform_indices = @transform_3, window_bounds = array<i64: 32, 32>}, {pipeline_mode = #tpu.pipeline_mode<synchronous>, transform_indices = @transform_4, window_bounds = array<i64: 1, 32>}, {pipeline_mode = #tpu.pipeline_mode<synchronous>, transform_indices = @transform_5, window_bounds = array<i64: 32, 32>}, {pipeline_mode = #tpu.pipeline_mode<synchronous>, transform_indices = @transform_6, window_bounds = array<i64: 1, 32>}, {pipeline_mode = #tpu.pipeline_mode<synchronous>, transform_indices = @transform_7, window_bounds = array<i64: 32, 32>}, {pipeline_mode = #tpu.pipeline_mode<synchronous>, transform_indices = @transform_8, window_bounds = array<i64: 1, 32>}, {pipeline_mode = #tpu.pipeline_mode<synchronous>, transform_indices = @transform_9, window_bounds = array<i64: 32, 32>}, {pipeline_mode = #tpu.pipeline_mode<synchronous>, transform_indices = @transform_10, window_bounds = array<i64: 1, 32>}, {pipeline_mode = #tpu.pipeline_mode<synchronous>, transform_indices = @transform_11, window_bounds = array<i64: 32, 4>}, {pipeline_mode = #tpu.pipeline_mode<synchronous>, transform_indices = @transform_12, window_bounds = array<i64: 1, 4>}, {transform_indices = @transform_13, window_bounds = array<i64: 8, 4>}]} {
    %c0 = arith.constant 0 : index
    %c0_0 = arith.constant 0 : index
    %0 = vector.load %arg1[%c0, %c0_0] : memref<8x4xf32, #tpu.memory_space<vmem>>, vector<8x4xf32>
    %c0_1 = arith.constant 0 : index
    %c0_2 = arith.constant 0 : index
    %1 = vector.load %arg2[%c0_1, %c0_2] : memref<4x32xf32, #tpu.memory_space<vmem>>, vector<4x32xf32>
    %cst = arith.constant dense<0.000000e+00> : vector<8x32xf32>
    %2 = tpu.matmul %0, %1, %cst {dimension_numbers = #tpu.dot_dimension_numbers<[1], [0], [0], [1], [0, 0, 1, 1], [], []>} : vector<8x4xf32>, vector<4x32xf32>, vector<8x32xf32> -> vector<8x32xf32>
    %c0_3 = arith.constant 0 : index
    %c0_4 = arith.constant 0 : index
    %3 = vector.load %arg3[%c0_3, %c0_4] : memref<1x32xf32, #tpu.memory_space<vmem>>, vector<1x32xf32>
    %4 = vector.broadcast %3 : vector<1x32xf32> to vector<8x32xf32>
    %5 = arith.addf %2, %4 : vector<8x32xf32>
    %cst_5 = arith.constant 5.000000e-01 : f32
    %6 = vector.broadcast %cst_5 : f32 to vector<8x32xf32>
    %7 = arith.mulf %6, %5 : vector<8x32xf32>
    %cst_6 = arith.constant 0.707106769 : f32
    %8 = vector.broadcast %cst_6 : f32 to vector<8x32xf32>
    %9 = arith.mulf %5, %8 : vector<8x32xf32>
    %10 = math.erf %9 : vector<8x32xf32>
    %cst_7 = arith.constant 1.000000e+00 : f32
    %11 = vector.broadcast %cst_7 : f32 to vector<8x32xf32>
    %12 = arith.addf %11, %10 : vector<8x32xf32>
    %13 = arith.mulf %7, %12 : vector<8x32xf32>
    %c0_8 = arith.constant 0 : index
    %c0_9 = arith.constant 0 : index
    %14 = vector.load %arg4[%c0_8, %c0_9] : memref<32x32xf32, #tpu.memory_space<vmem>>, vector<32x32xf32>
    %cst_10 = arith.constant dense<0.000000e+00> : vector<8x32xf32>
    %15 = tpu.matmul %13, %14, %cst_10 {dimension_numbers = #tpu.dot_dimension_numbers<[1], [0], [0], [1], [0, 0, 1, 1], [], []>} : vector<8x32xf32>, vector<32x32xf32>, vector<8x32xf32> -> vector<8x32xf32>
    %c0_11 = arith.constant 0 : index
    %c0_12 = arith.constant 0 : index
    %16 = vector.load %arg5[%c0_11, %c0_12] : memref<1x32xf32, #tpu.memory_space<vmem>>, vector<1x32xf32>
    %17 = vector.broadcast %16 : vector<1x32xf32> to vector<8x32xf32>
    %18 = arith.addf %15, %17 : vector<8x32xf32>
    %cst_13 = arith.constant 5.000000e-01 : f32
    %19 = vector.broadcast %cst_13 : f32 to vector<8x32xf32>
    %20 = arith.mulf %19, %18 : vector<8x32xf32>
    %cst_14 = arith.constant 0.707106769 : f32
    %21 = vector.broadcast %cst_14 : f32 to vector<8x32xf32>
    %22 = arith.mulf %18, %21 : vector<8x32xf32>
    %23 = math.erf %22 : vector<8x32xf32>
    %cst_15 = arith.constant 1.000000e+00 : f32
    %24 = vector.broadcast %cst_15 : f32 to vector<8x32xf32>
    %25 = arith.addf %24, %23 : vector<8x32xf32>
    %26 = arith.mulf %20, %25 : vector<8x32xf32>
    %c0_16 = arith.constant 0 : index
    %c0_17 = arith.constant 0 : index
    %27 = vector.load %arg6[%c0_16, %c0_17] : memref<32x32xf32, #tpu.memory_space<vmem>>, vector<32x32xf32>
    %cst_18 = arith.constant dense<0.000000e+00> : vector<8x32xf32>
    %28 = tpu.matmul %26, %27, %cst_18 {dimension_numbers = #tpu.dot_dimension_numbers<[1], [0], [0], [1], [0, 0, 1, 1], [], []>} : vector<8x32xf32>, vector<32x32xf32>, vector<8x32xf32> -> vector<8x32xf32>
    %c0_19 = arith.constant 0 : index
    %c0_20 = arith.constant 0 : index
    %29 = vector.load %arg7[%c0_19, %c0_20] : memref<1x32xf32, #tpu.memory_space<vmem>>, vector<1x32xf32>
    %30 = vector.broadcast %29 : vector<1x32xf32> to vector<8x32xf32>
    %31 = arith.addf %28, %30 : vector<8x32xf32>
    %cst_21 = arith.constant 5.000000e-01 : f32
    %32 = vector.broadcast %cst_21 : f32 to vector<8x32xf32>
    %33 = arith.mulf %32, %31 : vector<8x32xf32>
    %cst_22 = arith.constant 0.707106769 : f32
    %34 = vector.broadcast %cst_22 : f32 to vector<8x32xf32>
    %35 = arith.mulf %31, %34 : vector<8x32xf32>
    %36 = math.erf %35 : vector<8x32xf32>
    %cst_23 = arith.constant 1.000000e+00 : f32
    %37 = vector.broadcast %cst_23 : f32 to vector<8x32xf32>
    %38 = arith.addf %37, %36 : vector<8x32xf32>
    %39 = arith.mulf %33, %38 : vector<8x32xf32>
    %c0_24 = arith.constant 0 : index
    %c0_25 = arith.constant 0 : index
    %40 = vector.load %arg8[%c0_24, %c0_25] : memref<32x32xf32, #tpu.memory_space<vmem>>, vector<32x32xf32>
    %cst_26 = arith.constant dense<0.000000e+00> : vector<8x32xf32>
    %41 = tpu.matmul %39, %40, %cst_26 {dimension_numbers = #tpu.dot_dimension_numbers<[1], [0], [0], [1], [0, 0, 1, 1], [], []>} : vector<8x32xf32>, vector<32x32xf32>, vector<8x32xf32> -> vector<8x32xf32>
    %c0_27 = arith.constant 0 : index
    %c0_28 = arith.constant 0 : index
    %42 = vector.load %arg9[%c0_27, %c0_28] : memref<1x32xf32, #tpu.memory_space<vmem>>, vector<1x32xf32>
    %43 = vector.broadcast %42 : vector<1x32xf32> to vector<8x32xf32>
    %44 = arith.addf %41, %43 : vector<8x32xf32>
    %cst_29 = arith.constant 5.000000e-01 : f32
    %45 = vector.broadcast %cst_29 : f32 to vector<8x32xf32>
    %46 = arith.mulf %45, %44 : vector<8x32xf32>
    %cst_30 = arith.constant 0.707106769 : f32
    %47 = vector.broadcast %cst_30 : f32 to vector<8x32xf32>
    %48 = arith.mulf %44, %47 : vector<8x32xf32>
    %49 = math.erf %48 : vector<8x32xf32>
    %cst_31 = arith.constant 1.000000e+00 : f32
    %50 = vector.broadcast %cst_31 : f32 to vector<8x32xf32>
    %51 = arith.addf %50, %49 : vector<8x32xf32>
    %52 = arith.mulf %46, %51 : vector<8x32xf32>
    %c0_32 = arith.constant 0 : index
    %c0_33 = arith.constant 0 : index
    %53 = vector.load %arg10[%c0_32, %c0_33] : memref<32x32xf32, #tpu.memory_space<vmem>>, vector<32x32xf32>
    %cst_34 = arith.constant dense<0.000000e+00> : vector<8x32xf32>
    %54 = tpu.matmul %52, %53, %cst_34 {dimension_numbers = #tpu.dot_dimension_numbers<[1], [0], [0], [1], [0, 0, 1, 1], [], []>} : vector<8x32xf32>, vector<32x32xf32>, vector<8x32xf32> -> vector<8x32xf32>
    %c0_35 = arith.constant 0 : index
    %c0_36 = arith.constant 0 : index
    %55 = vector.load %arg11[%c0_35, %c0_36] : memref<1x32xf32, #tpu.memory_space<vmem>>, vector<1x32xf32>
    %56 = vector.broadcast %55 : vector<1x32xf32> to vector<8x32xf32>
    %57 = arith.addf %54, %56 : vector<8x32xf32>
    %cst_37 = arith.constant 5.000000e-01 : f32
    %58 = vector.broadcast %cst_37 : f32 to vector<8x32xf32>
    %59 = arith.mulf %58, %57 : vector<8x32xf32>
    %cst_38 = arith.constant 0.707106769 : f32
    %60 = vector.broadcast %cst_38 : f32 to vector<8x32xf32>
    %61 = arith.mulf %57, %60 : vector<8x32xf32>
    %62 = math.erf %61 : vector<8x32xf32>
    %cst_39 = arith.constant 1.000000e+00 : f32
    %63 = vector.broadcast %cst_39 : f32 to vector<8x32xf32>
    %64 = arith.addf %63, %62 : vector<8x32xf32>
    %65 = arith.mulf %59, %64 : vector<8x32xf32>
    %c0_40 = arith.constant 0 : index
    %c0_41 = arith.constant 0 : index
    %66 = vector.load %arg12[%c0_40, %c0_41] : memref<32x4xf32, #tpu.memory_space<vmem>>, vector<32x4xf32>
    %cst_42 = arith.constant dense<0.000000e+00> : vector<8x4xf32>
    %67 = tpu.matmul %65, %66, %cst_42 {dimension_numbers = #tpu.dot_dimension_numbers<[1], [0], [0], [1], [0, 0, 1, 1], [], []>} : vector<8x32xf32>, vector<32x4xf32>, vector<8x4xf32> -> vector<8x4xf32>
    %c0_43 = arith.constant 0 : index
    %c0_44 = arith.constant 0 : index
    %68 = vector.load %arg13[%c0_43, %c0_44] : memref<1x4xf32, #tpu.memory_space<vmem>>, vector<1x4xf32>
    %69 = vector.broadcast %68 : vector<1x4xf32> to vector<8x4xf32>
    %70 = arith.addf %67, %69 : vector<8x4xf32>
    %c0_45 = arith.constant 0 : index
    %c0_46 = arith.constant 0 : index
    %71 = vector.load %arg14[%c0_45, %c0_46] : memref<8x4xf32, #tpu.memory_space<vmem>>, vector<8x4xf32>
    tpu.vector_store %arg14[%c0_45, %c0_46], %70 {strides = array<i32>} : memref<8x4xf32, #tpu.memory_space<vmem>>, vector<8x4xf32>,
    return
  }
  func.func @transform_0(%arg0: i32) -> (i32, i32) {
    %c0_i32 = arith.constant 0 : i32
    %c0_i32_0 = arith.constant 0 : i32
    return %arg0, %c0_i32 : i32, i32
  }
  func.func @transform_1(%arg0: i32) -> (i32, i32) {
    %c0_i32 = arith.constant 0 : i32
    %c0_i32_0 = arith.constant 0 : i32
    %c0_i32_1 = arith.constant 0 : i32
    return %c0_i32, %c0_i32_0 : i32, i32
  }
  func.func @transform_2(%arg0: i32) -> (i32, i32) {
    %c0_i32 = arith.constant 0 : i32
    %c0_i32_0 = arith.constant 0 : i32
    %c0_i32_1 = arith.constant 0 : i32
    return %c0_i32, %c0_i32_0 : i32, i32
  }
  func.func @transform_3(%arg0: i32) -> (i32, i32) {
    %c0_i32 = arith.constant 0 : i32
    %c0_i32_0 = arith.constant 0 : i32
    %c0_i32_1 = arith.constant 0 : i32
    return %c0_i32, %c0_i32_0 : i32, i32
  }
  func.func @transform_4(%arg0: i32) -> (i32, i32) {
    %c0_i32 = arith.constant 0 : i32
    %c0_i32_0 = arith.constant 0 : i32
    %c0_i32_1 = arith.constant 0 : i32
    return %c0_i32, %c0_i32_0 : i32, i32
  }
  func.func @transform_5(%arg0: i32) -> (i32, i32) {
    %c0_i32 = arith.constant 0 : i32
    %c0_i32_0 = arith.constant 0 : i32
    %c0_i32_1 = arith.constant 0 : i32
    return %c0_i32, %c0_i32_0 : i32, i32
  }
  func.func @transform_6(%arg0: i32) -> (i32, i32) {
    %c0_i32 = arith.constant 0 : i32
    %c0_i32_0 = arith.constant 0 : i32
    %c0_i32_1 = arith.constant 0 : i32
    return %c0_i32, %c0_i32_0 : i32, i32
  }
  func.func @transform_7(%arg0: i32) -> (i32, i32) {
    %c0_i32 = arith.constant 0 : i32
    %c0_i32_0 = arith.constant 0 : i32
    %c0_i32_1 = arith.constant 0 : i32
    return %c0_i32, %c0_i32_0 : i32, i32
  }
  func.func @transform_8(%arg0: i32) -> (i32, i32) {
    %c0_i32 = arith.constant 0 : i32
    %c0_i32_0 = arith.constant 0 : i32
    %c0_i32_1 = arith.constant 0 : i32
    return %c0_i32, %c0_i32_0 : i32, i32
  }
  func.func @transform_9(%arg0: i32) -> (i32, i32) {
    %c0_i32 = arith.constant 0 : i32
    %c0_i32_0 = arith.constant 0 : i32
    %c0_i32_1 = arith.constant 0 : i32
    return %c0_i32, %c0_i32_0 : i32, i32
  }
  func.func @transform_10(%arg0: i32) -> (i32, i32) {
    %c0_i32 = arith.constant 0 : i32
    %c0_i32_0 = arith.constant 0 : i32
    %c0_i32_1 = arith.constant 0 : i32
    return %c0_i32, %c0_i32_0 : i32, i32
  }
  func.func @transform_11(%arg0: i32) -> (i32, i32) {
    %c0_i32 = arith.constant 0 : i32
    %c0_i32_0 = arith.constant 0 : i32
    %c0_i32_1 = arith.constant 0 : i32
    return %c0_i32, %c0_i32_0 : i32, i32
  }
  func.func @transform_12(%arg0: i32) -> (i32, i32) {
    %c0_i32 = arith.constant 0 : i32
    %c0_i32_0 = arith.constant 0 : i32
    %c0_i32_1 = arith.constant 0 : i32
    return %c0_i32, %c0_i32_0 : i32, i32
  }
  func.func @transform_13(%arg0: i32) -> (i32, i32) {
    %c0_i32 = arith.constant 0 : i32
    %c0_i32_0 = arith.constant 0 : i32
    return %arg0, %c0_i32 : i32, i32
  }
}

</mosaic_0001>

<llo_original>
// kernel: mlp_forward.1
$region0: #{mlp_forward.1}
  #allocation0 [shape = 'u32[]', space=smem, size = 0x4, offset = 0x4, fixed_abs, tag = 'smem constant byte address 0x4 - core index']
  #allocation1 [shape = 'u32[144,128]{1,0:T(1,128)}', space=vmem, size = 0x12000, scoped, tag = 'internal scratch']
  %s0 = inlined_call_operand.vmem [shape: f32[8,4], index: 0, kind: input, shape index: {}]
  %s1 = inlined_call_operand.vmem [shape: f32[4,32], index: 1, kind: input, shape index: {}]
  %s2 = inlined_call_operand.vmem [shape: f32[1,32], index: 2, kind: input, shape index: {}]
  %s3 = inlined_call_operand.vmem [shape: f32[32,32], index: 3, kind: input, shape index: {}]
  %s4 = inlined_call_operand.hbm [shape: f32[1,32], index: 4, kind: input, shape index: {}]
  %s5 = inlined_call_operand.vmem [shape: f32[32,32], index: 5, kind: input, shape index: {}]
  %s6 = inlined_call_operand.hbm [shape: f32[1,32], index: 6, kind: input, shape index: {}]
  %s7 = inlined_call_operand.hbm [shape: f32[32,32], index: 7, kind: input, shape index: {}]
  %s8 = inlined_call_operand.hbm [shape: f32[1,32], index: 8, kind: input, shape index: {}]
  %s9 = inlined_call_operand.hbm [shape: f32[32,32], index: 9, kind: input, shape index: {}]
  %s10 = inlined_call_operand.vmem [shape: f32[1,32], index: 10, kind: input, shape index: {}]
  %s11 = inlined_call_operand.vmem [shape: f32[32,4], index: 11, kind: input, shape index: {}]
  %s12 = inlined_call_operand.vmem [shape: f32[1,4], index: 12, kind: input, shape index: {}]
  %s13 = inlined_call_operand.vmem [shape: f32[8,4], index: 13, kind: output, shape index: {}]
  %s14 = sld [smem:[#allocation0]]
  $region82: #{mlp_forward.1} parent=0
    _
  %s16 = ssub.s32 1, %s14
  %s17 = scalar_select 0, %s16, %s14
  $region1: #{mlp_forward.1} parent=0
    #allocation2 [shape = 'u8[512]{0}', space=vmem, size = 0x400, scoped, tag = 'input window, operand 4, single buffered']
    #allocation3 [shape = 's32[1]{0}', space=sflag, size = 0x4, scoped, tag = 'scoped memory for mlp_forward.1']
    #allocation4 [shape = 'u8[512]{0}', space=vmem, size = 0x400, scoped, tag = 'input window, operand 6, single buffered']
    #allocation5 [shape = 's32[1]{0}', space=sflag, size = 0x4, scoped, tag = 'scoped memory for mlp_forward.1']
    #allocation6 [shape = 'u8[16384]{0}', space=vmem, size = 0x4000, scoped, tag = 'input window, operand 7, single buffered']
    #allocation7 [shape = 'u8[512]{0}', space=vmem, size = 0x400, scoped, tag = 'input window, operand 8, single buffered']
    #allocation8 [shape = 's32[1]{0}', space=sflag, size = 0x4, scoped, tag = 'scoped memory for mlp_forward.1']
    #allocation9 [shape = 'u8[16384]{0}', space=vmem, size = 0x4000, scoped, tag = 'input window, operand 9, single buffered']
    %18 = vsyncpa [#allocation3], 0
    %19 = vsyncpa [#allocation5], 0
    %20 = vsyncpa [#allocation8], 0
    // Predicated region
    $region2: #{mlp_forward.1} parent=1 // pred_check
      _
    $region3: #{mlp_forward.1} parent=1 // pred_check_branch
      %22 = sbr.rel (0) target = $region5
    $region4: #{mlp_forward.1} parent=1 // pred_region
      _
    $region5: #{mlp_forward.1} parent=1 // pred_fallthru
      _
    // Predicated region
    $region6: #{mlp_forward.1} parent=1 // pred_check
      _
    $region7: #{mlp_forward.1} parent=1 // pred_check_branch
      %24 = sbr.rel (0) target = $region9
    $region8: #{mlp_forward.1} parent=1 // pred_region
      _
    $region9: #{mlp_forward.1} parent=1 // pred_fallthru
      _
    // Predicated region
    $region10: #{mlp_forward.1} parent=1 // pred_check
      _
    $region11: #{mlp_forward.1} parent=1 // pred_check_branch
      %26 = sbr.rel (0) target = $region13
    $region12: #{mlp_forward.1} parent=1 // pred_region
      _
    $region13: #{mlp_forward.1} parent=1 // pred_fallthru
      _
    // Predicated region
    $region14: #{mlp_forward.1} parent=1 // pred_check
      _
    $region15: #{mlp_forward.1} parent=1 // pred_check_branch
      %28 = sbr.rel (0) target = $region17
    $region16: #{mlp_forward.1} parent=1 // pred_region
      _
    $region17: #{mlp_forward.1} parent=1 // pred_fallthru
      _
    // Predicated region
    $region18: #{mlp_forward.1} parent=1 // pred_check
      _
    $region19: #{mlp_forward.1} parent=1 // pred_check_branch
      %30 = sbr.rel (0) target = $region21
    $region20: #{mlp_forward.1} parent=1 // pred_region
      %s32 = ssub.s32 16, 16
      %33 = vsyncadd [#allocation3], %s32
      %s35 = sshll.u32 [#allocation2], 4
      %s36 = int_to_ptr.vmem [resolvable:$true] %s35
      %38 = dma.hbm_to_vmem [thread:$0]  %s4, 16, %s36, [#allocation3]
    $region21: #{mlp_forward.1} parent=1 // pred_fallthru
      _
    // Predicated region
    $region22: #{mlp_forward.1} parent=1 // pred_check
      _
    $region23: #{mlp_forward.1} parent=1 // pred_check_branch
      %40 = sbr.rel (0) target = $region25
    $region24: #{mlp_forward.1} parent=1 // pred_region
      _
    $region25: #{mlp_forward.1} parent=1 // pred_fallthru
      _
    // Predicated region
    $region26: #{mlp_forward.1} parent=1 // pred_check
      _
    $region27: #{mlp_forward.1} parent=1 // pred_check_branch
      %42 = sbr.rel (0) target = $region29
    $region28: #{mlp_forward.1} parent=1 // pred_region
      %s44 = ssub.s32 16, 16
      %45 = vsyncadd [#allocation5], %s44
      %s47 = sshll.u32 [#allocation4], 4
      %s48 = int_to_ptr.vmem [resolvable:$true] %s47
      %50 = dma.hbm_to_vmem [thread:$0]  %s6, 16, %s48, [#allocation5]
    $region29: #{mlp_forward.1} parent=1 // pred_fallthru
      _
    // Predicated region
    $region30: #{mlp_forward.1} parent=1 // pred_check
      _
    $region31: #{mlp_forward.1} parent=1 // pred_check_branch
      %52 = sbr.rel (0) target = $region33
    $region32: #{mlp_forward.1} parent=1 // pred_region
      %s54 = ssub.s32 512, 512
      %55 = vsyncadd [#allocation5], %s54
      %s56 = sshll.u32 [#allocation6], 4
      %s57 = int_to_ptr.vmem [resolvable:$true] %s56
      %62 = dma.hbm_to_vmem [thread:$0]  %s7, 512, %s57, [#allocation5], 128, 128, 8
    $region33: #{mlp_forward.1} parent=1 // pred_fallthru
      _
    // Predicated region
    $region34: #{mlp_forward.1} parent=1 // pred_check
      _
    $region35: #{mlp_forward.1} parent=1 // pred_check_branch
      %64 = sbr.rel (0) target = $region37
    $region36: #{mlp_forward.1} parent=1 // pred_region
      %s66 = ssub.s32 16, 16
      %67 = vsyncadd [#allocation8], %s66
      %s69 = sshll.u32 [#allocation7], 4
      %s70 = int_to_ptr.vmem [resolvable:$true] %s69
      %72 = dma.hbm_to_vmem [thread:$0]  %s8, 16, %s70, [#allocation8]
    $region37: #{mlp_forward.1} parent=1 // pred_fallthru
      _
    // Predicated region
    $region38: #{mlp_forward.1} parent=1 // pred_check
      _
    $region39: #{mlp_forward.1} parent=1 // pred_check_branch
      %74 = sbr.rel (0) target = $region41
    $region40: #{mlp_forward.1} parent=1 // pred_region
      %s76 = ssub.s32 512, 512
      %77 = vsyncadd [#allocation8], %s76
      %s78 = sshll.u32 [#allocation9], 4
      %s79 = int_to_ptr.vmem [resolvable:$true] %s78
      %84 = dma.hbm_to_vmem [thread:$0]  %s9, 512, %s79, [#allocation8], 128, 128, 8
    $region41: #{mlp_forward.1} parent=1 // pred_fallthru
      _
    // Predicated region
    $region42: #{mlp_forward.1} parent=1 // pred_check
      _
    $region43: #{mlp_forward.1} parent=1 // pred_check_branch
      %86 = sbr.rel (0) target = $region45
    $region44: #{mlp_forward.1} parent=1 // pred_region
      _
    $region45: #{mlp_forward.1} parent=1 // pred_fallthru
      _
    // Predicated region
    $region46: #{mlp_forward.1} parent=1 // pred_check
      _
    $region47: #{mlp_forward.1} parent=1 // pred_check_branch
      %88 = sbr.rel (0) target = $region49
    $region48: #{mlp_forward.1} parent=1 // pred_region
      _
    $region49: #{mlp_forward.1} parent=1 // pred_fallthru
      _
    // Predicated region
    $region50: #{mlp_forward.1} parent=1 // pred_check
      _
    $region51: #{mlp_forward.1} parent=1 // pred_check_branch
      %90 = sbr.rel (0) target = $region53
    $region52: #{mlp_forward.1} parent=1 // pred_region
      _
    $region53: #{mlp_forward.1} parent=1 // pred_fallthru
      _
    // Predicated region
    $region54: #{mlp_forward.1} parent=1 // pred_check
      _
    $region55: #{mlp_forward.1} parent=1 // pred_check_branch
      %92 = sbr.rel (0) target = $region57
    $region56: #{mlp_forward.1} parent=1 // pred_region
      %93 = dma.done [#allocation3], 16
    $region57: #{mlp_forward.1} parent=1 // pred_fallthru
      _
    // Predicated region
    $region58: #{mlp_forward.1} parent=1 // pred_check
      _
    $region59: #{mlp_forward.1} parent=1 // pred_check_branch
      %95 = sbr.rel (0) target = $region61
    $region60: #{mlp_forward.1} parent=1 // pred_region
      %96 = dma.done [#allocation5], 16
    $region61: #{mlp_forward.1} parent=1 // pred_fallthru
      _
    // Predicated region
    $region62: #{mlp_forward.1} parent=1 // pred_check
      _
    $region63: #{mlp_forward.1} parent=1 // pred_check_branch
      %98 = sbr.rel (0) target = $region65
    $region64: #{mlp_forward.1} parent=1 // pred_region
      %99 = dma.done [#allocation5], 512
    $region65: #{mlp_forward.1} parent=1 // pred_fallthru
      _
    // Predicated region
    $region66: #{mlp_forward.1} parent=1 // pred_check
      _
    $region67: #{mlp_forward.1} parent=1 // pred_check_branch
      %101 = sbr.rel (0) target = $region69
    $region68: #{mlp_forward.1} parent=1 // pred_region
      %102 = dma.done [#allocation8], 16
    $region69: #{mlp_forward.1} parent=1 // pred_fallthru
      _
    // Predicated region
    $region70: #{mlp_forward.1} parent=1 // pred_check
      _
    $region71: #{mlp_forward.1} parent=1 // pred_check_branch
      %104 = sbr.rel (0) target = $region73
    $region72: #{mlp_forward.1} parent=1 // pred_region
      %105 = dma.done [#allocation8], 512
    $region73: #{mlp_forward.1} parent=1 // pred_fallthru
      _
    %v106 = vld [vmem:[%s0] sm:$0xff]
    %v107 = vld [vmem:[%s1] sm:$0xf]
    %v108 = vld [vmem:[%s2] sm:$0x1]
    %v110 = vlaneseq
    %v111 = vshrl.u32 %v110, 7
    %v112 = vsub.s32 0, %v111
    %v113 = vrot.slane %v108, %v112
    %vm115 = vcmask 31744
    %v117 = vsel %vm115, %v106, 0
    %vm119 = vcmask 1043456
    %v121 = vsel %vm119, %v107, 0
    %123 = vmatprep.subr.mxu0 0.0
    %124 = vmatpush1.msra.mxu0 0.0
    %125 = vmatprep.subr.mxu0 0.0
    %126 = vmatpush1.msra.mxu0 0.0
    %127 = vmatprep.subr.mxu0 0.0
    %128 = vmatpush1.msra.mxu0 0.0
    %129 = vmatprep.subr.mxu0 0.0
    %130 = vmatpush1.msra.mxu0 0.0
    %131 = vmatprep.subr.mxu0 0.0
    %132 = vmatpush1.msra.mxu0 0.0
    %133 = vmatprep.subr.mxu0 0.0
    %134 = vmatpush1.msra.mxu0 0.0
    %135 = vmatprep.subr.mxu0 0.0
    %136 = vmatpush1.msra.mxu0 0.0
    %137 = vmatprep.subr.mxu0 0.0
    %138 = vmatpush1.msra.mxu0 0.0
    %139 = vmatprep.subr.mxu0 0.0
    %140 = vmatpush1.msra.mxu0 0.0
    %141 = vmatprep.subr.mxu0 0.0
    %142 = vmatpush1.msra.mxu0 0.0
    %143 = vmatprep.subr.mxu0 0.0
    %144 = vmatpush1.msra.mxu0 0.0
    %145 = vmatprep.subr.mxu0 0.0
    %146 = vmatpush1.msra.mxu0 0.0
    %147 = vmatprep.subr.mxu0 0.0
    %148 = vmatpush1.msra.mxu0 0.0
    %149 = vmatprep.subr.mxu0 0.0
    %150 = vmatpush1.msra.mxu0 0.0
    %151 = vmatprep.subr.mxu0 0.0
    %152 = vmatpush1.msra.mxu0 0.0
    %153 = vmatprep.subr.mxu0 0.0
    %154 = vmatpush1.msra.mxu0 %v121
    %155 = vmatprep.subr.mxu0 0.0
    %156 = vmatpush2.msra.mxu0 0.0
    %157 = vmatprep.subr.mxu0 0.0
    %158 = vmatpush2.msra.mxu0 0.0
    %159 = vmatprep.subr.mxu0 0.0
    %160 = vmatpush2.msra.mxu0 0.0
    %161 = vmatprep.subr.mxu0 0.0
    %162 = vmatpush2.msra.mxu0 0.0
    %163 = vmatprep.subr.mxu0 0.0
    %164 = vmatpush2.msra.mxu0 0.0
    %165 = vmatprep.subr.mxu0 0.0
    %166 = vmatpush2.msra.mxu0 0.0
    %167 = vmatprep.subr.mxu0 0.0
    %168 = vmatpush2.msra.mxu0 0.0
    %169 = vmatprep.subr.mxu0 0.0
    %170 = vmatpush2.msra.mxu0 0.0
    %171 = vmatprep.subr.mxu0 0.0
    %172 = vmatpush2.msra.mxu0 0.0
    %173 = vmatprep.subr.mxu0 0.0
    %174 = vmatpush2.msra.mxu0 0.0
    %175 = vmatprep.subr.mxu0 0.0
    %176 = vmatpush2.msra.mxu0 0.0
    %177 = vmatprep.subr.mxu0 0.0
    %178 = vmatpush2.msra.mxu0 0.0
    %179 = vmatprep.subr.mxu0 0.0
    %180 = vmatpush2.msra.mxu0 0.0
    %181 = vmatprep.subr.mxu0 0.0
    %182 = vmatpush2.msra.mxu0 0.0
    %183 = vmatprep.subr.mxu0 0.0
    %184 = vmatpush2.msra.mxu0 0.0
    %185 = vmatprep.subr.mxu0 0.0
    %186 = vmatpush2.msra.mxu0 0.0
    %187 = vmatprep.mubr.f32.mxu0 0.0
    %188 = vmatmul.mubr.f32.gmra.mxu0 %v117
    %v189 = vpop.f32.mrf.mxu0
    %v190 = vadd.f32 %v113, %v189
    %v191 = vpop.f32.mrf.mxu0
    %192 = vdwg.mxu0
    %v193 = vmul.f32 %v190, 0.5
    %v194 = vmul.f32 %v190, 0.70710677
    %v195 = verf.f32.pop %v194
    %v196 = vadd.f32 %v195, 1.0
    %v197 = vmul.f32 %v193, %v196
    %v198 = vld [vmem:[%s3] sm:$0xff]
    %v199 = vld [vmem:[%s3 + $0x8] sm:$0xff]
    %v200 = vld [vmem:[%s3 + $0x10] sm:$0xff]
    %v201 = vld [vmem:[%s3 + $0x18] sm:$0xff]
    %v202 = vld [vmem:[#allocation2] sm:$0x1]
    %v204 = vlaneseq
    %v205 = vshrl.u32 %v204, 7
    %v206 = vsub.s32 0, %v205
    %v207 = vrot.slane %v202, %v206
    %vm209 = vcmask 261120
    %v211 = vsel %vm209, %v197, 0
    %213 = vmatprep.subr.mxu0 0.0
    %214 = vmatpush1.msra.mxu0 0.0
    %215 = vmatprep.subr.mxu0 0.0
    %216 = vmatpush1.msra.mxu0 0.0
    %217 = vmatprep.subr.mxu0 0.0
    %218 = vmatpush1.msra.mxu0 0.0
    %219 = vmatprep.subr.mxu0 0.0
    %220 = vmatpush1.msra.mxu0 0.0
    %221 = vmatprep.subr.mxu0 0.0
    %222 = vmatpush1.msra.mxu0 0.0
    %223 = vmatprep.subr.mxu0 0.0
    %224 = vmatpush1.msra.mxu0 0.0
    %225 = vmatprep.subr.mxu0 0.0
    %226 = vmatpush1.msra.mxu0 0.0
    %227 = vmatprep.subr.mxu0 0.0
    %228 = vmatpush1.msra.mxu0 0.0
    %229 = vmatprep.subr.mxu0 0.0
    %230 = vmatpush1.msra.mxu0 0.0
    %231 = vmatprep.subr.mxu0 0.0
    %232 = vmatpush1.msra.mxu0 0.0
    %233 = vmatprep.subr.mxu0 0.0
    %234 = vmatpush1.msra.mxu0 0.0
    %235 = vmatprep.subr.mxu0 0.0
    %236 = vmatpush1.msra.mxu0 0.0
    %237 = vmatprep.subr.mxu0 0.0
    %238 = vmatpush1.msra.mxu0 %v201
    %239 = vmatprep.subr.mxu0 0.0
    %240 = vmatpush1.msra.mxu0 %v200
    %241 = vmatprep.subr.mxu0 0.0
    %242 = vmatpush1.msra.mxu0 %v199
    %243 = vmatprep.subr.mxu0 0.0
    %244 = vmatpush1.msra.mxu0 %v198
    %245 = vmatprep.subr.mxu0 0.0
    %246 = vmatpush2.msra.mxu0 0.0
    %247 = vmatprep.subr.mxu0 0.0
    %248 = vmatpush2.msra.mxu0 0.0
    %249 = vmatprep.subr.mxu0 0.0
    %250 = vmatpush2.msra.mxu0 0.0
    %251 = vmatprep.subr.mxu0 0.0
    %252 = vmatpush2.msra.mxu0 0.0
    %253 = vmatprep.subr.mxu0 0.0
    %254 = vmatpush2.msra.mxu0 0.0
    %255 = vmatprep.subr.mxu0 0.0
    %256 = vmatpush2.msra.mxu0 0.0
    %257 = vmatprep.subr.mxu0 0.0
    %258 = vmatpush2.msra.mxu0 0.0
    %259 = vmatprep.subr.mxu0 0.0
    %260 = vmatpush2.msra.mxu0 0.0
    %261 = vmatprep.subr.mxu0 0.0
    %262 = vmatpush2.msra.mxu0 0.0
    %263 = vmatprep.subr.mxu0 0.0
    %264 = vmatpush2.msra.mxu0 0.0
    %265 = vmatprep.subr.mxu0 0.0
    %266 = vmatpush2.msra.mxu0 0.0
    %267 = vmatprep.subr.mxu0 0.0
    %268 = vmatpush2.msra.mxu0 0.0
    %269 = vmatprep.subr.mxu0 0.0
    %270 = vmatpush2.msra.mxu0 0.0
    %271 = vmatprep.subr.mxu0 0.0
    %272 = vmatpush2.msra.mxu0 0.0
    %273 = vmatprep.subr.mxu0 0.0
    %274 = vmatpush2.msra.mxu0 0.0
    %275 = vmatprep.subr.mxu0 0.0
    %276 = vmatpush2.msra.mxu0 0.0
    %277 = vmatprep.mubr.f32.mxu0 0.0
    %278 = vmatmul.mubr.f32.gmra.mxu0 %v211
    %v279 = vpop.f32.mrf.mxu0
    %v280 = vadd.f32 %v207, %v279
    %v281 = vpop.f32.mrf.mxu0
    %282 = vdwg.mxu0
    %v283 = vmul.f32 %v280, 0.5
    %v284 = vmul.f32 %v280, 0.70710677
    %v285 = verf.f32.pop %v284
    %v286 = vadd.f32 %v285, 1.0
    %v287 = vmul.f32 %v283, %v286
    %v288 = vld [vmem:[%s5] sm:$0xff]
    %v289 = vld [vmem:[%s5 + $0x8] sm:$0xff]
    %v290 = vld [vmem:[%s5 + $0x10] sm:$0xff]
    %v291 = vld [vmem:[%s5 + $0x18] sm:$0xff]
    %v292 = vld [vmem:[#allocation4] sm:$0x1]
    %v294 = vlaneseq
    %v295 = vshrl.u32 %v294, 7
    %v296 = vsub.s32 0, %v295
    %v297 = vrot.slane %v292, %v296
    %v300 = vsel %vm209, %v287, 0
    %302 = vmatprep.subr.mxu0 0.0
    %303 = vmatpush1.msra.mxu0 0.0
    %304 = vmatprep.subr.mxu0 0.0
    %305 = vmatpush1.msra.mxu0 0.0
    %306 = vmatprep.subr.mxu0 0.0
    %307 = vmatpush1.msra.mxu0 0.0
    %308 = vmatprep.subr.mxu0 0.0
    %309 = vmatpush1.msra.mxu0 0.0
    %310 = vmatprep.subr.mxu0 0.0
    %311 = vmatpush1.msra.mxu0 0.0
    %312 = vmatprep.subr.mxu0 0.0
    %313 = vmatpush1.msra.mxu0 0.0
    %314 = vmatprep.subr.mxu0 0.0
    %315 = vmatpush1.msra.mxu0 0.0
    %316 = vmatprep.subr.mxu0 0.0
    %317 = vmatpush1.msra.mxu0 0.0
    %318 = vmatprep.subr.mxu0 0.0
    %319 = vmatpush1.msra.mxu0 0.0
    %320 = vmatprep.subr.mxu0 0.0
    %321 = vmatpush1.msra.mxu0 0.0
    %322 = vmatprep.subr.mxu0 0.0
    %323 = vmatpush1.msra.mxu0 0.0
    %324 = vmatprep.subr.mxu0 0.0
    %325 = vmatpush1.msra.mxu0 0.0
    %326 = vmatprep.subr.mxu0 0.0
    %327 = vmatpush1.msra.mxu0 %v291
    %328 = vmatprep.subr.mxu0 0.0
    %329 = vmatpush1.msra.mxu0 %v290
    %330 = vmatprep.subr.mxu0 0.0
    %331 = vmatpush1.msra.mxu0 %v289
    %332 = vmatprep.subr.mxu0 0.0
    %333 = vmatpush1.msra.mxu0 %v288
    %334 = vmatprep.subr.mxu0 0.0
    %335 = vmatpush2.msra.mxu0 0.0
    %336 = vmatprep.subr.mxu0 0.0
    %337 = vmatpush2.msra.mxu0 0.0
    %338 = vmatprep.subr.mxu0 0.0
    %339 = vmatpush2.msra.mxu0 0.0
    %340 = vmatprep.subr.mxu0 0.0
    %341 = vmatpush2.msra.mxu0 0.0
    %342 = vmatprep.subr.mxu0 0.0
    %343 = vmatpush2.msra.mxu0 0.0
    %344 = vmatprep.subr.mxu0 0.0
    %345 = vmatpush2.msra.mxu0 0.0
    %346 = vmatprep.subr.mxu0 0.0
    %347 = vmatpush2.msra.mxu0 0.0
    %348 = vmatprep.subr.mxu0 0.0
    %349 = vmatpush2.msra.mxu0 0.0
    %350 = vmatprep.subr.mxu0 0.0
    %351 = vmatpush2.msra.mxu0 0.0
    %352 = vmatprep.subr.mxu0 0.0
    %353 = vmatpush2.msra.mxu0 0.0
    %354 = vmatprep.subr.mxu0 0.0
    %355 = vmatpush2.msra.mxu0 0.0
    %356 = vmatprep.subr.mxu0 0.0
    %357 = vmatpush2.msra.mxu0 0.0
    %358 = vmatprep.subr.mxu0 0.0
    %359 = vmatpush2.msra.mxu0 0.0
    %360 = vmatprep.subr.mxu0 0.0
    %361 = vmatpush2.msra.mxu0 0.0
    %362 = vmatprep.subr.mxu0 0.0
    %363 = vmatpush2.msra.mxu0 0.0
    %364 = vmatprep.subr.mxu0 0.0
    %365 = vmatpush2.msra.mxu0 0.0
    %366 = vmatprep.mubr.f32.mxu0 0.0
    %367 = vmatmul.mubr.f32.gmra.mxu0 %v300
    %v368 = vpop.f32.mrf.mxu0
    %v369 = vadd.f32 %v297, %v368
    %v370 = vpop.f32.mrf.mxu0
    %371 = vdwg.mxu0
    %v372 = vmul.f32 %v369, 0.5
    %v373 = vmul.f32 %v369, 0.70710677
    %v374 = verf.f32.pop %v373
    %v375 = vadd.f32 %v374, 1.0
    %v376 = vmul.f32 %v372, %v375
    %v377 = vld [vmem:[#allocation6] sm:$0xff]
    %v378 = vld [vmem:[#allocation6 + $0x8] sm:$0xff]
    %v379 = vld [vmem:[#allocation6 + $0x10] sm:$0xff]
    %v380 = vld [vmem:[#allocation6 + $0x18] sm:$0xff]
    %v381 = vld [vmem:[#allocation7] sm:$0x1]
    %v383 = vlaneseq
    %v384 = vshrl.u32 %v383, 7
    %v385 = vsub.s32 0, %v384
    %v386 = vrot.slane %v381, %v385
    %v389 = vsel %vm209, %v376, 0
    %391 = vmatprep.subr.mxu0 0.0
    %392 = vmatpush1.msra.mxu0 0.0
    %393 = vmatprep.subr.mxu0 0.0
    %394 = vmatpush1.msra.mxu0 0.0
    %395 = vmatprep.subr.mxu0 0.0
    %396 = vmatpush1.msra.mxu0 0.0
    %397 = vmatprep.subr.mxu0 0.0
    %398 = vmatpush1.msra.mxu0 0.0
    %399 = vmatprep.subr.mxu0 0.0
    %400 = vmatpush1.msra.mxu0 0.0
    %401 = vmatprep.subr.mxu0 0.0
    %402 = vmatpush1.msra.mxu0 0.0
    %403 = vmatprep.subr.mxu0 0.0
    %404 = vmatpush1.msra.mxu0 0.0
    %405 = vmatprep.subr.mxu0 0.0
    %406 = vmatpush1.msra.mxu0 0.0
    %407 = vmatprep.subr.mxu0 0.0
    %408 = vmatpush1.msra.mxu0 0.0
    %409 = vmatprep.subr.mxu0 0.0
    %410 = vmatpush1.msra.mxu0 0.0
    %411 = vmatprep.subr.mxu0 0.0
    %412 = vmatpush1.msra.mxu0 0.0
    %413 = vmatprep.subr.mxu0 0.0
    %414 = vmatpush1.msra.mxu0 0.0
    %415 = vmatprep.subr.mxu0 0.0
    %416 = vmatpush1.msra.mxu0 %v380
    %417 = vmatprep.subr.mxu0 0.0
    %418 = vmatpush1.msra.mxu0 %v379
    %419 = vmatprep.subr.mxu0 0.0
    %420 = vmatpush1.msra.mxu0 %v378
    %421 = vmatprep.subr.mxu0 0.0
    %422 = vmatpush1.msra.mxu0 %v377
    %423 = vmatprep.subr.mxu0 0.0
    %424 = vmatpush2.msra.mxu0 0.0
    %425 = vmatprep.subr.mxu0 0.0
    %426 = vmatpush2.msra.mxu0 0.0
    %427 = vmatprep.subr.mxu0 0.0
    %428 = vmatpush2.msra.mxu0 0.0
    %429 = vmatprep.subr.mxu0 0.0
    %430 = vmatpush2.msra.mxu0 0.0
    %431 = vmatprep.subr.mxu0 0.0
    %432 = vmatpush2.msra.mxu0 0.0
    %433 = vmatprep.subr.mxu0 0.0
    %434 = vmatpush2.msra.mxu0 0.0
    %435 = vmatprep.subr.mxu0 0.0
    %436 = vmatpush2.msra.mxu0 0.0
    %437 = vmatprep.subr.mxu0 0.0
    %438 = vmatpush2.msra.mxu0 0.0
    %439 = vmatprep.subr.mxu0 0.0
    %440 = vmatpush2.msra.mxu0 0.0
    %441 = vmatprep.subr.mxu0 0.0
    %442 = vmatpush2.msra.mxu0 0.0
    %443 = vmatprep.subr.mxu0 0.0
    %444 = vmatpush2.msra.mxu0 0.0
    %445 = vmatprep.subr.mxu0 0.0
    %446 = vmatpush2.msra.mxu0 0.0
    %447 = vmatprep.subr.mxu0 0.0
    %448 = vmatpush2.msra.mxu0 0.0
    %449 = vmatprep.subr.mxu0 0.0
    %450 = vmatpush2.msra.mxu0 0.0
    %451 = vmatprep.subr.mxu0 0.0
    %452 = vmatpush2.msra.mxu0 0.0
    %453 = vmatprep.subr.mxu0 0.0
    %454 = vmatpush2.msra.mxu0 0.0
    %455 = vmatprep.mubr.f32.mxu0 0.0
    %456 = vmatmul.mubr.f32.gmra.mxu0 %v389
    %v457 = vpop.f32.mrf.mxu0
    %v458 = vadd.f32 %v386, %v457
    %v459 = vpop.f32.mrf.mxu0
    %460 = vdwg.mxu0
    %v461 = vmul.f32 %v458, 0.5
    %v462 = vmul.f32 %v458, 0.70710677
    %v463 = verf.f32.pop %v462
    %v464 = vadd.f32 %v463, 1.0
    %v465 = vmul.f32 %v461, %v464
    %v466 = vld [vmem:[#allocation9] sm:$0xff]
    %v467 = vld [vmem:[#allocation9 + $0x8] sm:$0xff]
    %v468 = vld [vmem:[#allocation9 + $0x10] sm:$0xff]
    %v469 = vld [vmem:[#allocation9 + $0x18] sm:$0xff]
    %v470 = vld [vmem:[%s10] sm:$0x1]
    %v472 = vlaneseq
    %v473 = vshrl.u32 %v472, 7
    %v474 = vsub.s32 0, %v473
    %v475 = vrot.slane %v470, %v474
    %v478 = vsel %vm209, %v465, 0
    %480 = vmatprep.subr.mxu0 0.0
    %481 = vmatpush1.msra.mxu0 0.0
    %482 = vmatprep.subr.mxu0 0.0
    %483 = vmatpush1.msra.mxu0 0.0
    %484 = vmatprep.subr.mxu0 0.0
    %485 = vmatpush1.msra.mxu0 0.0
    %486 = vmatprep.subr.mxu0 0.0
    %487 = vmatpush1.msra.mxu0 0.0
    %488 = vmatprep.subr.mxu0 0.0
    %489 = vmatpush1.msra.mxu0 0.0
    %490 = vmatprep.subr.mxu0 0.0
    %491 = vmatpush1.msra.mxu0 0.0
    %492 = vmatprep.subr.mxu0 0.0
    %493 = vmatpush1.msra.mxu0 0.0
    %494 = vmatprep.subr.mxu0 0.0
    %495 = vmatpush1.msra.mxu0 0.0
    %496 = vmatprep.subr.mxu0 0.0
    %497 = vmatpush1.msra.mxu0 0.0
    %498 = vmatprep.subr.mxu0 0.0
    %499 = vmatpush1.msra.mxu0 0.0
    %500 = vmatprep.subr.mxu0 0.0
    %501 = vmatpush1.msra.mxu0 0.0
    %502 = vmatprep.subr.mxu0 0.0
    %503 = vmatpush1.msra.mxu0 0.0
    %504 = vmatprep.subr.mxu0 0.0
    %505 = vmatpush1.msra.mxu0 %v469
    %506 = vmatprep.subr.mxu0 0.0
    %507 = vmatpush1.msra.mxu0 %v468
    %508 = vmatprep.subr.mxu0 0.0
    %509 = vmatpush1.msra.mxu0 %v467
    %510 = vmatprep.subr.mxu0 0.0
    %511 = vmatpush1.msra.mxu0 %v466
    %512 = vmatprep.subr.mxu0 0.0
    %513 = vmatpush2.msra.mxu0 0.0
    %514 = vmatprep.subr.mxu0 0.0
    %515 = vmatpush2.msra.mxu0 0.0
    %516 = vmatprep.subr.mxu0 0.0
    %517 = vmatpush2.msra.mxu0 0.0
    %518 = vmatprep.subr.mxu0 0.0
    %519 = vmatpush2.msra.mxu0 0.0
    %520 = vmatprep.subr.mxu0 0.0
    %521 = vmatpush2.msra.mxu0 0.0
    %522 = vmatprep.subr.mxu0 0.0
    %523 = vmatpush2.msra.mxu0 0.0
    %524 = vmatprep.subr.mxu0 0.0
    %525 = vmatpush2.msra.mxu0 0.0
    %526 = vmatprep.subr.mxu0 0.0
    %527 = vmatpush2.msra.mxu0 0.0
    %528 = vmatprep.subr.mxu0 0.0
    %529 = vmatpush2.msra.mxu0 0.0
    %530 = vmatprep.subr.mxu0 0.0
    %531 = vmatpush2.msra.mxu0 0.0
    %532 = vmatprep.subr.mxu0 0.0
    %533 = vmatpush2.msra.mxu0 0.0
    %534 = vmatprep.subr.mxu0 0.0
    %535 = vmatpush2.msra.mxu0 0.0
    %536 = vmatprep.subr.mxu0 0.0
    %537 = vmatpush2.msra.mxu0 0.0
    %538 = vmatprep.subr.mxu0 0.0
    %539 = vmatpush2.msra.mxu0 0.0
    %540 = vmatprep.subr.mxu0 0.0
    %541 = vmatpush2.msra.mxu0 0.0
    %542 = vmatprep.subr.mxu0 0.0
    %543 = vmatpush2.msra.mxu0 0.0
    %544 = vmatprep.mubr.f32.mxu0 0.0
    %545 = vmatmul.mubr.f32.gmra.mxu0 %v478
    %v546 = vpop.f32.mrf.mxu0
    %v547 = vadd.f32 %v475, %v546
    %v548 = vpop.f32.mrf.mxu0
    %549 = vdwg.mxu0
    %v550 = vmul.f32 %v547, 0.5
    %v551 = vmul.f32 %v547, 0.70710677
    %v552 = verf.f32.pop %v551
    %v553 = vadd.f32 %v552, 1.0
    %v554 = vmul.f32 %v550, %v553
    %v555 = vld [vmem:[%s11] sm:$0xff]
    %v556 = vld [vmem:[%s11 + $0x8] sm:$0xff]
    %v557 = vld [vmem:[%s11 + $0x10] sm:$0xff]
    %v558 = vld [vmem:[%s11 + $0x18] sm:$0xff]
    %v559 = vld [vmem:[%s12] sm:$0x1]
    %v561 = vlaneseq
    %v562 = vshrl.u32 %v561, 7
    %v563 = vsub.s32 0, %v562
    %v564 = vrot.slane %v559, %v563
    %v567 = vsel %vm209, %v554, 0
    %569 = vmatprep.subr.mxu0 0.0
    %570 = vmatpush1.msra.mxu0 0.0
    %571 = vmatprep.subr.mxu0 0.0
    %572 = vmatpush1.msra.mxu0 0.0
    %573 = vmatprep.subr.mxu0 0.0
    %574 = vmatpush1.msra.mxu0 0.0
    %575 = vmatprep.subr.mxu0 0.0
    %576 = vmatpush1.msra.mxu0 0.0
    %577 = vmatprep.subr.mxu0 0.0
    %578 = vmatpush1.msra.mxu0 0.0
    %579 = vmatprep.subr.mxu0 0.0
    %580 = vmatpush1.msra.mxu0 0.0
    %581 = vmatprep.subr.mxu0 0.0
    %582 = vmatpush1.msra.mxu0 0.0
    %583 = vmatprep.subr.mxu0 0.0
    %584 = vmatpush1.msra.mxu0 0.0
    %585 = vmatprep.subr.mxu0 0.0
    %586 = vmatpush1.msra.mxu0 0.0
    %587 = vmatprep.subr.mxu0 0.0
    %588 = vmatpush1.msra.mxu0 0.0
    %589 = vmatprep.subr.mxu0 0.0
    %590 = vmatpush1.msra.mxu0 0.0
    %591 = vmatprep.subr.mxu0 0.0
    %592 = vmatpush1.msra.mxu0 0.0
    %593 = vmatprep.subr.mxu0 0.0
    %594 = vmatpush1.msra.mxu0 %v558
    %595 = vmatprep.subr.mxu0 0.0
    %596 = vmatpush1.msra.mxu0 %v557
    %597 = vmatprep.subr.mxu0 0.0
    %598 = vmatpush1.msra.mxu0 %v556
    %599 = vmatprep.subr.mxu0 0.0
    %600 = vmatpush1.msra.mxu0 %v555
    %601 = vmatprep.subr.mxu0 0.0
    %602 = vmatpush2.msra.mxu0 0.0
    %603 = vmatprep.subr.mxu0 0.0
    %604 = vmatpush2.msra.mxu0 0.0
    %605 = vmatprep.subr.mxu0 0.0
    %606 = vmatpush2.msra.mxu0 0.0
    %607 = vmatprep.subr.mxu0 0.0
    %608 = vmatpush2.msra.mxu0 0.0
    %609 = vmatprep.subr.mxu0 0.0
    %610 = vmatpush2.msra.mxu0 0.0
    %611 = vmatprep.subr.mxu0 0.0
    %612 = vmatpush2.msra.mxu0 0.0
    %613 = vmatprep.subr.mxu0 0.0
    %614 = vmatpush2.msra.mxu0 0.0
    %615 = vmatprep.subr.mxu0 0.0
    %616 = vmatpush2.msra.mxu0 0.0
    %617 = vmatprep.subr.mxu0 0.0
    %618 = vmatpush2.msra.mxu0 0.0
    %619 = vmatprep.subr.mxu0 0.0
    %620 = vmatpush2.msra.mxu0 0.0
    %621 = vmatprep.subr.mxu0 0.0
    %622 = vmatpush2.msra.mxu0 0.0
    %623 = vmatprep.subr.mxu0 0.0
    %624 = vmatpush2.msra.mxu0 0.0
    %625 = vmatprep.subr.mxu0 0.0
    %626 = vmatpush2.msra.mxu0 0.0
    %627 = vmatprep.subr.mxu0 0.0
    %628 = vmatpush2.msra.mxu0 0.0
    %629 = vmatprep.subr.mxu0 0.0
    %630 = vmatpush2.msra.mxu0 0.0
    %631 = vmatprep.subr.mxu0 0.0
    %632 = vmatpush2.msra.mxu0 0.0
    %633 = vmatprep.mubr.f32.mxu0 0.0
    %634 = vmatmul.mubr.f32.gmra.mxu0 %v567
    %v635 = vpop.f32.mrf.mxu0
    %v636 = vadd.f32 %v564, %v635
    %v637 = vpop.f32.mrf.mxu0
    %638 = vdwg.mxu0
    %639 = vst.msk [vmem:[%s13] sm:$0xff] %vm115, %v636
    // Predicated region
    $region74: #{mlp_forward.1} parent=1 // pred_check
      _
    $region75: #{mlp_forward.1} parent=1 // pred_check_branch
      %641 = sbr.rel (0) target = $region77
    $region76: #{mlp_forward.1} parent=1 // pred_region
      _
    $region77: #{mlp_forward.1} parent=1 // pred_fallthru
      _
    // Predicated region
    $region78: #{mlp_forward.1} parent=1 // pred_check
      _
    $region79: #{mlp_forward.1} parent=1 // pred_check_branch
      %643 = sbr.rel (0) target = $region81
    $region80: #{mlp_forward.1} parent=1 // pred_region
      _
    $region81: #{mlp_forward.1} parent=1 // pred_fallthru
      _
    %644 = vsyncpa [#allocation3], 1
    %645 = vsyncpa [#allocation5], 1
    %646 = vsyncpa [#allocation8], 1

</llo_original>
